<compile_context>
chip_gen: v6e
topology: v6e:2x2x1
jax: 0.10.0
libtpu: 0.0.40
codegen_flags: <defaults>
</compile_context>

<pallas_src>
import functools

import jax
import jax.numpy as jnp
from jax.experimental import pallas as pl
from jax.experimental.pallas import tpu as pltpu


# ----------------------------------------------------------------------------- helpers
def _round_up(x, m):
    return ((x + m - 1) // m) * m


def _sublane(dtype):
    # sublane packing multiple per dtype (f32 -> 8, bf16 -> 16, int8/fp8 -> 32)
    return {1: 32, 2: 16, 4: 8}.get(jnp.dtype(dtype).itemsize, 8)


def _vmem_budget_bytes():
    cap = 0
    try:
        cap = int(getattr(pltpu.get_tpu_info(), "vmem_capacity_bytes", 0) or 0)
    except Exception:
        cap = 0
    if cap <= 0:
        cap = 64 * 1024 * 1024                  # conservative default = v7x per-TC VMEM
    limit = min(cap - 16 * 1024 * 1024, 96 * 1024 * 1024)   # 96 MiB on v5e/v6e, 48 MiB on v7x
    return max(limit, 32 * 1024 * 1024)


def _pick_tile_n(n, per_row_bytes, fixed_bytes, budget, sub=8, cap=2048):
    """Largest batch tile whose full (double-buffered, tile-padded) working set fits."""
    avail = budget - fixed_bytes
    max_tile = int(avail // max(per_row_bytes, 1))
    max_tile = max(sub, (max_tile // sub) * sub)
    max_tile = min(max_tile, cap)
    if n > max_tile:
        return max_tile
    # Whole batch fits in one block: still split so the grid has >=2 (ideally 4)
    # steps -> software pipelining + both TensorCores on v7x via "parallel".
    if n >= 4 * sub:
        return min(max_tile, _round_up(pl.cdiv(n, 4), sub))
    if n >= 2 * sub:
        return min(max_tile, _round_up(pl.cdiv(n, 2), sub))
    return n                                    # tiny batch: single block == full dim


# ----------------------------------------------------------------------------- kernels
def _folded_fc_kernel(x_ref, w_ref, b_ref, o_ref):
    # x_ref : [tile_n, C*HW]   activations (native dtype), lane-dense
    # w_ref : [C*HW, K_pad]    weight with 1/(H*W) pooling folded in
    # b_ref : [1, K_pad]       f32 bias
    # o_ref : [tile_n, K_pad]  logits (downstream dtype)
    x = x_ref[...]
    if x.dtype != w_ref.dtype:
        x = x.astype(w_ref.dtype)
    logits = jnp.dot(x, w_ref[...], preferred_element_type=jnp.float32)
    o_ref[...] = (logits + b_ref[...]).astype(o_ref.dtype)


def _pooled_fc_kernel(hw, needs_mask, x_ref, w_ref, b_ref, o_ref, acc_ref):
    # x_ref   : [tile_n, hw_chunk, C]  channels-last activations (C lane-dense)
    # w_ref   : [C, K_pad]             weight with 1/(H*W) folded in
    # b_ref   : [1, K_pad]             f32 bias
    # o_ref   : [tile_n, K_pad]        logits
    # acc_ref : [tile_n, C] f32        spatial-sum accumulator (grid axis 1 = reduction)
    j = pl.program_id(1)

    @pl.when(j == 0)
    def _():
        acc_ref[...] = jnp.zeros_like(acc_ref)

    x = x_ref[...]
    if needs_mask:
        hw_chunk = x.shape[1]
        sidx = j * hw_chunk + jax.lax.broadcasted_iota(jnp.int32, x.shape, 1)
        x = jnp.where(sidx < hw, x, jnp.zeros_like(x))      # zero ragged spatial tail
    acc_ref[...] += jnp.sum(x, axis=1, dtype=jnp.float32)

    @pl.when(j == pl.num_programs(1) - 1)
    def _():
        pooled = acc_ref[...].astype(w_ref.dtype)           # bf16 MXU operands when bf16 in
        logits = jnp.dot(pooled, w_ref[...], preferred_element_type=jnp.float32)
        o_ref[...] = (logits + b_ref[...]).astype(o_ref.dtype)


# ----------------------------------------------------------------------------- wrapper
def basic_head(x, weight, bias, *, out_dtype=None):
    """BasicHead forward: global average pool -> flatten -> Linear.

    x      : [N, C, H, W]
    weight : [K, C]   (PyTorch nn.Linear layout)
    bias   : [K]
    """
    n, c, h, w_sp = x.shape
    k = weight.shape[0]
    hw = h * w_sp
    out_dtype = jnp.dtype(x.dtype if out_dtype is None else out_dtype)

    # MXU operand dtype follows the activations (bf16 native on v7x; f32 kept for
    # f32 inputs so results match the reference at tight tolerance).
    compute_dtype = jnp.bfloat16 if x.dtype == jnp.bfloat16 else jnp.float32

    k_pad = _round_up(max(k, 1), 128)                       # lane-dense logit stores
    vmem_limit = _vmem_budget_bytes()
    solve_budget = vmem_limit - 2 * 1024 * 1024             # headroom for compiler scratch

    w_scaled = weight.T.astype(jnp.float32) / jnp.float32(hw)   # [C, K], mean folded in
    b_p = jnp.zeros((1, k_pad), jnp.float32).at[0, :k].set(bias.astype(jnp.float32))

    x_item = jnp.dtype(x.dtype).itemsize
    out_item = out_dtype.itemsize
    w_item = jnp.dtype(compute_dtype).itemsize
    sub_x = _sublane(x.dtype)
    sub_w = _sublane(compute_dtype)

    folded_w_bytes = c * hw * k_pad * w_item
    use_folded = folded_w_bytes <= 4 * 1024 * 1024          # small-C: fold pooling into W

    if use_folded:
        # --- Path A: one dense MXU matmul per batch tile --------------------------
        chw = c * hw
        w_big = jnp.broadcast_to(w_scaled[:, None, :], (c, hw, k)).reshape(chw, k)
        w_p = (jnp.zeros((chw, k_pad), jnp.float32).at[:, :k].set(w_big)
               .astype(compute_dtype))
        x2 = x.reshape(n, chw)                              # glue reshape only, no extra pass

        x_row = _round_up(chw, 128) * x_item                # lane-padded VMEM row
        out_row = k_pad * out_item
        fixed = 2 * (_round_up(chw, sub_w) * k_pad * w_item) + 2 * 8 * k_pad * 4
        per_row = 2 * (x_row + out_row)                     # double-buffered in & out
        tile_n = _pick_tile_n(n, per_row, fixed, solve_budget, sub=8)
        grid = (pl.cdiv(n, tile_n),)                        # ragged last block handled by Pallas

        cost = pl.CostEstimate(
            flops=int(2 * n * chw * k_pad),
            transcendentals=0,
            bytes_accessed=int(n * chw * x_item + chw * k_pad * w_item
                               + k_pad * 4 + n * k_pad * out_item),
        )

        out = pl.pallas_call(
            _folded_fc_kernel,
            out_shape=jax.ShapeDtypeStruct((n, k_pad), out_dtype),
            grid=grid,
            in_specs=[
                pl.BlockSpec((tile_n, chw), lambda i: (i, 0)),   # streamed over N
                pl.BlockSpec((chw, k_pad), lambda i: (0, 0)),    # resident weight
                pl.BlockSpec((1, k_pad), lambda i: (0, 0)),      # resident bias
            ],
            out_specs=pl.BlockSpec((tile_n, k_pad), lambda i: (i, 0)),
            compiler_params=pltpu.CompilerParams(
                dimension_semantics=("parallel",),
                vmem_limit_bytes=vmem_limit,
            ),
            cost_estimate=cost,
        )(x2, w_p, b_p)
    else:
        # --- Path B: channels-last pooled reduction + small FC --------------------
        # NOTE: NHWC producers can skip this transpose; it is layout plumbing for NCHW.
        x3 = jnp.transpose(x.reshape(n, c, hw), (0, 2, 1))  # [N, HW, C], C on lanes
        w_p = (jnp.zeros((c, k_pad), jnp.float32).at[:, :k].set(w_scaled)
               .astype(compute_dtype))

        c_lanes = _round_up(c, 128)
        out_row = k_pad * out_item
        acc_row = c_lanes * 4
        fixed = 2 * (_round_up(c, sub_w) * k_pad * w_item) + 2 * 8 * k_pad * 4

        def x_row_bytes(hc):
            return _round_up(hc, sub_x) * c_lanes * x_item

        # Chunk the spatial axis so even a minimal 8-row batch tile fits the budget.
        hw_chunk = hw
        while hw_chunk > 8 and (8 * (2 * (x_row_bytes(hw_chunk) + out_row) + acc_row)
                                + fixed > solve_budget):
            hw_chunk = max(8, (hw_chunk // 2 // 8) * 8)
        num_hw = pl.cdiv(hw, hw_chunk)
        needs_mask = (num_hw * hw_chunk != hw)

        per_row = 2 * (x_row_bytes(hw_chunk) + out_row) + acc_row
        tile_n = _pick_tile_n(n, per_row, fixed, solve_budget, sub=8)
        grid = (pl.cdiv(n, tile_n), num_hw)                 # reduction axis last

        cost = pl.CostEstimate(
            flops=int(n * hw * c + 2 * n * c * k_pad),
            transcendentals=0,
            bytes_accessed=int(n * hw * c * x_item + c * k_pad * w_item
                               + k_pad * 4 + n * k_pad * out_item),
        )

        out = pl.pallas_call(
            functools.partial(_pooled_fc_kernel, hw, needs_mask),
            out_shape=jax.ShapeDtypeStruct((n, k_pad), out_dtype),
            grid=grid,
            in_specs=[
                pl.BlockSpec((tile_n, hw_chunk, c), lambda i, j: (i, j, 0)),
                pl.BlockSpec((c, k_pad), lambda i, j: (0, 0)),   # resident weight
                pl.BlockSpec((1, k_pad), lambda i, j: (0, 0)),   # resident bias
            ],
            out_specs=pl.BlockSpec((tile_n, k_pad), lambda i, j: (i, 0)),
            scratch_shapes=[pltpu.VMEM((tile_n, c), jnp.float32)],
            compiler_params=pltpu.CompilerParams(
                dimension_semantics=("parallel", "arbitrary"),
                vmem_limit_bytes=vmem_limit,
            ),
            cost_estimate=cost,
        )(x3, w_p, b_p)

    return out[:, :k]


# ----------------------------------------------------------------------------- demo
if __name__ == "__main__":
    k1, k2, k3, k4, k5, k6 = jax.random.split(jax.random.PRNGKey(0), 6)

    # Path A demo — module config in_channels=4, num_classes=8, x [2, 4, 16, 16].
    N, C, H, W, K = 2, 4, 16, 16, 8
    x = jax.random.normal(k1, (N, C, H, W), dtype=jnp.float32)
    bound = 1.0 / float(C) ** 0.5
    weight = jax.random.uniform(k2, (K, C), jnp.float32, -bound, bound)
    bias = jax.random.uniform(k3, (K,), jnp.float32, -bound, bound)

    out = jax.block_until_ready(basic_head(x, weight, bias))
    ref = jnp.mean(x, axis=(2, 3)) @ weight.T + bias
    assert out.shape == (N, K)
    assert jnp.allclose(out, ref, atol=1e-5, rtol=1e-5), float(jnp.max(jnp.abs(out - ref)))

    # Path B demo — larger-C backbone-style shape exercises the channels-last
    # chunked-reduction kernel (f32 weight is > 4 MiB when folded).
    N2, C2, H2, W2, K2 = 16, 256, 8, 8, 10
    x2 = jax.random.normal(k4, (N2, C2, H2, W2), dtype=jnp.float32)
    b2 = 1.0 / float(C2) ** 0.5
    weight2 = jax.random.uniform(k5, (K2, C2), jnp.float32, -b2, b2)
    bias2 = jax.random.uniform(k6, (K2,), jnp.float32, -b2, b2)

    out2 = jax.block_until_ready(basic_head(x2, weight2, bias2))
    ref2 = jnp.mean(x2, axis=(2, 3)) @ weight2.T + bias2
    assert out2.shape == (N2, K2)
    assert jnp.allclose(out2, ref2, atol=1e-4, rtol=1e-4), float(jnp.max(jnp.abs(out2 - ref2)))

    print("KERNEL_OK")
</pallas_src>

<mosaic_0001>
module attributes {stable_mosaic.version = 11 : i64} {
  func.func @_folded_fc_kernel(%arg0: i32, %arg1: memref<2x1024xf32, #tpu.memory_space<vmem>>, %arg2: memref<1024x128xf32, #tpu.memory_space<vmem>>, %arg3: memref<1x128xf32, #tpu.memory_space<vmem>>, %arg4: memref<2x128xf32, #tpu.memory_space<vmem>>) attributes {dimension_semantics = [#tpu.dimension_semantics<parallel>], iteration_bounds = array<i64: 1>, scalar_prefetch = 0 : i64, scratch_operands = 0 : i64, tpu.core_type = #tpu.core_type<tc>, window_params = [{transform_indices = @transform_0, window_bounds = array<i64: 2, 1024>}, {pipeline_mode = #tpu.pipeline_mode<synchronous>, transform_indices = @transform_1, window_bounds = array<i64: 1024, 128>}, {pipeline_mode = #tpu.pipeline_mode<synchronous>, transform_indices = @transform_2, window_bounds = array<i64: 1, 128>}, {transform_indices = @transform_3, window_bounds = array<i64: 2, 128>}]} {
    %c0 = arith.constant 0 : index
    %c0_0 = arith.constant 0 : index
    %0 = vector.load %arg1[%c0, %c0_0] : memref<2x1024xf32, #tpu.memory_space<vmem>>, vector<2x1024xf32>
    %c0_1 = arith.constant 0 : index
    %c0_2 = arith.constant 0 : index
    %1 = vector.load %arg2[%c0_1, %c0_2] : memref<1024x128xf32, #tpu.memory_space<vmem>>, vector<1024x128xf32>
    %cst = arith.constant dense<0.000000e+00> : vector<2x128xf32>
    %2 = tpu.matmul %0, %1, %cst {dimension_numbers = #tpu.dot_dimension_numbers<[1], [0], [0], [1], [0, 0, 1, 1], [], []>} : vector<2x1024xf32>, vector<1024x128xf32>, vector<2x128xf32> -> vector<2x128xf32>
    %c0_3 = arith.constant 0 : index
    %c0_4 = arith.constant 0 : index
    %3 = vector.load %arg3[%c0_3, %c0_4] : memref<1x128xf32, #tpu.memory_space<vmem>>, vector<1x128xf32>
    %4 = vector.broadcast %3 : vector<1x128xf32> to vector<2x128xf32>
    %5 = arith.addf %2, %4 : vector<2x128xf32>
    %c0_5 = arith.constant 0 : index
    %c0_6 = arith.constant 0 : index
    %6 = vector.load %arg4[%c0_5, %c0_6] : memref<2x128xf32, #tpu.memory_space<vmem>>, vector<2x128xf32>
    tpu.vector_store %arg4[%c0_5, %c0_6], %5 {strides = array<i32>} : memref<2x128xf32, #tpu.memory_space<vmem>>, vector<2x128xf32>,
    return
  }
  func.func @transform_0(%arg0: i32) -> (i32, i32) {
    %c0_i32 = arith.constant 0 : i32
    %c0_i32_0 = arith.constant 0 : i32
    return %arg0, %c0_i32 : i32, i32
  }
  func.func @transform_1(%arg0: i32) -> (i32, i32) {
    %c0_i32 = arith.constant 0 : i32
    %c0_i32_0 = arith.constant 0 : i32
    %c0_i32_1 = arith.constant 0 : i32
    return %c0_i32, %c0_i32_0 : i32, i32
  }
  func.func @transform_2(%arg0: i32) -> (i32, i32) {
    %c0_i32 = arith.constant 0 : i32
    %c0_i32_0 = arith.constant 0 : i32
    %c0_i32_1 = arith.constant 0 : i32
    return %c0_i32, %c0_i32_0 : i32, i32
  }
  func.func @transform_3(%arg0: i32) -> (i32, i32) {
    %c0_i32 = arith.constant 0 : i32
    %c0_i32_0 = arith.constant 0 : i32
    return %arg0, %c0_i32 : i32, i32
  }
}

</mosaic_0001>

<llo_original>
// kernel: tpu_custom_call.1
$region0: #{tpu_custom_call.1}
  #allocation0 [shape = 'u32[]', space=smem, size = 0x4, offset = 0x4, fixed_abs, tag = 'smem constant byte address 0x4 - core index']
  #allocation1 [shape = 'u32[144,128]{1,0:T(1,128)}', space=vmem, size = 0x12000, scoped, tag = 'internal scratch']
  %s0 = inlined_call_operand.hbm [shape: f32[2,1024], index: 0, kind: input, shape index: {}]
  %s1 = inlined_call_operand.hbm [shape: f32[1024,128], index: 1, kind: input, shape index: {}]
  %s2 = inlined_call_operand.vmem [shape: f32[1,128], index: 2, kind: input, shape index: {}]
  %s3 = inlined_call_operand.hbm [shape: f32[2,128], index: 3, kind: output, shape index: {}]
  %s4 = sld [smem:[#allocation0]]
  $region30: #{tpu_custom_call.1} parent=0
    _
  %s6 = ssub.s32 1, %s4
  %s7 = scalar_select 0, %s6, %s4
  $region1: #{tpu_custom_call.1} parent=0
    #allocation2 [shape = 'u8[8192]{0}', space=vmem, size = 0x2000, scoped, tag = 'input window, operand 0, single buffered']
    #allocation3 [shape = 's32[1]{0}', space=sflag, size = 0x4, scoped, tag = 'scoped memory for tpu_custom_call.1']
    #allocation4 [shape = 's32[1]{0}', space=sflag, size = 0x4, scoped, tag = 'scoped memory for tpu_custom_call.1']
    #allocation5 [shape = 'u8[524288]{0}', space=vmem, size = 0x80000, scoped, tag = 'input window, operand 1, single buffered']
    #allocation6 [shape = 's32[1]{0}', space=sflag, size = 0x4, scoped, tag = 'scoped memory for tpu_custom_call.1']
    #allocation7 [shape = 'u8[1024]{0}', space=vmem, size = 0x400, scoped, tag = 'output window, operand 0, single buffered']
    %8 = vsyncpa [#allocation3], 0
    %9 = vsyncpa [#allocation6], 0
    %10 = vsyncpa [#allocation4], 0
    // Predicated region
    $region2: #{tpu_custom_call.1} parent=1 // pred_check
      _
    $region3: #{tpu_custom_call.1} parent=1 // pred_check_branch
      %12 = sbr.rel (0) target = $region5
    $region4: #{tpu_custom_call.1} parent=1 // pred_region
      %s14 = ssub.s32 256, 256
      %15 = vsyncadd [#allocation3], %s14
      %s17 = sshll.u32 [#allocation2], 4
      %s18 = int_to_ptr.vmem [resolvable:$true] %s17
      %20 = dma.hbm_to_vmem [thread:$0]  %s0, 256, %s18, [#allocation3]
    $region5: #{tpu_custom_call.1} parent=1 // pred_fallthru
      _
    // Predicated region
    $region6: #{tpu_custom_call.1} parent=1 // pred_check
      _
    $region7: #{tpu_custom_call.1} parent=1 // pred_check_branch
      %22 = sbr.rel (0) target = $region9
    $region8: #{tpu_custom_call.1} parent=1 // pred_region
      %s24 = ssub.s32 16384, 16384
      %25 = vsyncadd [#allocation6], %s24
      %s26 = sshll.u32 [#allocation5], 4
      %s27 = int_to_ptr.vmem [resolvable:$true] %s26
      %32 = dma.hbm_to_vmem [thread:$0]  %s1, 16384, %s27, [#allocation6], 128, 128, 8
    $region9: #{tpu_custom_call.1} parent=1 // pred_fallthru
      _
    // Predicated region
    $region10: #{tpu_custom_call.1} parent=1 // pred_check
      _
    $region11: #{tpu_custom_call.1} parent=1 // pred_check_branch
      %34 = sbr.rel (0) target = $region13
    $region12: #{tpu_custom_call.1} parent=1 // pred_region
      _
    $region13: #{tpu_custom_call.1} parent=1 // pred_fallthru
      _
    // Predicated region
    $region14: #{tpu_custom_call.1} parent=1 // pred_check
      _
    $region15: #{tpu_custom_call.1} parent=1 // pred_check_branch
      %36 = sbr.rel (0) target = $region17
    $region16: #{tpu_custom_call.1} parent=1 // pred_region
      %37 = dma.done [#allocation3], 256
    $region17: #{tpu_custom_call.1} parent=1 // pred_fallthru
      _
    // Predicated region
    $region18: #{tpu_custom_call.1} parent=1 // pred_check
      _
    $region19: #{tpu_custom_call.1} parent=1 // pred_check_branch
      %39 = sbr.rel (0) target = $region21
    $region20: #{tpu_custom_call.1} parent=1 // pred_region
      %40 = dma.done [#allocation6], 16384
    $region21: #{tpu_custom_call.1} parent=1 // pred_fallthru
      _
    %v41 = vld [vmem:[#allocation2] sm:$0xff]
    %v42 = vld [vmem:[#allocation2 + $0x8] sm:$0xff]
    %v43 = vld [vmem:[#allocation5] sm:$0xff]
    %v44 = vld [vmem:[#allocation5 + $0x8] sm:$0xff]
    %v45 = vld [vmem:[#allocation5 + $0x10] sm:$0xff]
    %v46 = vld [vmem:[#allocation5 + $0x18] sm:$0xff]
    %v47 = vld [vmem:[#allocation5 + $0x20] sm:$0xff]
    %v48 = vld [vmem:[#allocation5 + $0x28] sm:$0xff]
    %v49 = vld [vmem:[#allocation5 + $0x30] sm:$0xff]
    %v50 = vld [vmem:[#allocation5 + $0x38] sm:$0xff]
    %v51 = vld [vmem:[#allocation5 + $0x40] sm:$0xff]
    %v52 = vld [vmem:[#allocation5 + $0x48] sm:$0xff]
    %v53 = vld [vmem:[#allocation5 + $0x50] sm:$0xff]
    %v54 = vld [vmem:[#allocation5 + $0x58] sm:$0xff]
    %v55 = vld [vmem:[#allocation5 + $0x60] sm:$0xff]
    %v56 = vld [vmem:[#allocation5 + $0x68] sm:$0xff]
    %v57 = vld [vmem:[#allocation5 + $0x70] sm:$0xff]
    %v58 = vld [vmem:[#allocation5 + $0x78] sm:$0xff]
    %v59 = vld [vmem:[#allocation5 + $0x80] sm:$0xff]
    %v60 = vld [vmem:[#allocation5 + $0x88] sm:$0xff]
    %v61 = vld [vmem:[#allocation5 + $0x90] sm:$0xff]
    %v62 = vld [vmem:[#allocation5 + $0x98] sm:$0xff]
    %v63 = vld [vmem:[#allocation5 + $0xa0] sm:$0xff]
    %v64 = vld [vmem:[#allocation5 + $0xa8] sm:$0xff]
    %v65 = vld [vmem:[#allocation5 + $0xb0] sm:$0xff]
    %v66 = vld [vmem:[#allocation5 + $0xb8] sm:$0xff]
    %v67 = vld [vmem:[#allocation5 + $0xc0] sm:$0xff]
    %v68 = vld [vmem:[#allocation5 + $0xc8] sm:$0xff]
    %v69 = vld [vmem:[#allocation5 + $0xd0] sm:$0xff]
    %v70 = vld [vmem:[#allocation5 + $0xd8] sm:$0xff]
    %v71 = vld [vmem:[#allocation5 + $0xe0] sm:$0xff]
    %v72 = vld [vmem:[#allocation5 + $0xe8] sm:$0xff]
    %v73 = vld [vmem:[#allocation5 + $0xf0] sm:$0xff]
    %v74 = vld [vmem:[#allocation5 + $0xf8] sm:$0xff]
    %v75 = vld [vmem:[#allocation5 + $0x100] sm:$0xff]
    %v76 = vld [vmem:[#allocation5 + $0x108] sm:$0xff]
    %v77 = vld [vmem:[#allocation5 + $0x110] sm:$0xff]
    %v78 = vld [vmem:[#allocation5 + $0x118] sm:$0xff]
    %v79 = vld [vmem:[#allocation5 + $0x120] sm:$0xff]
    %v80 = vld [vmem:[#allocation5 + $0x128] sm:$0xff]
    %v81 = vld [vmem:[#allocation5 + $0x130] sm:$0xff]
    %v82 = vld [vmem:[#allocation5 + $0x138] sm:$0xff]
    %v83 = vld [vmem:[#allocation5 + $0x140] sm:$0xff]
    %v84 = vld [vmem:[#allocation5 + $0x148] sm:$0xff]
    %v85 = vld [vmem:[#allocation5 + $0x150] sm:$0xff]
    %v86 = vld [vmem:[#allocation5 + $0x158] sm:$0xff]
    %v87 = vld [vmem:[#allocation5 + $0x160] sm:$0xff]
    %v88 = vld [vmem:[#allocation5 + $0x168] sm:$0xff]
    %v89 = vld [vmem:[#allocation5 + $0x170] sm:$0xff]
    %v90 = vld [vmem:[#allocation5 + $0x178] sm:$0xff]
    %v91 = vld [vmem:[#allocation5 + $0x180] sm:$0xff]
    %v92 = vld [vmem:[#allocation5 + $0x188] sm:$0xff]
    %v93 = vld [vmem:[#allocation5 + $0x190] sm:$0xff]
    %v94 = vld [vmem:[#allocation5 + $0x198] sm:$0xff]
    %v95 = vld [vmem:[#allocation5 + $0x1a0] sm:$0xff]
    %v96 = vld [vmem:[#allocation5 + $0x1a8] sm:$0xff]
    %v97 = vld [vmem:[#allocation5 + $0x1b0] sm:$0xff]
    %v98 = vld [vmem:[#allocation5 + $0x1b8] sm:$0xff]
    %v99 = vld [vmem:[#allocation5 + $0x1c0] sm:$0xff]
    %v100 = vld [vmem:[#allocation5 + $0x1c8] sm:$0xff]
    %v101 = vld [vmem:[#allocation5 + $0x1d0] sm:$0xff]
    %v102 = vld [vmem:[#allocation5 + $0x1d8] sm:$0xff]
    %v103 = vld [vmem:[#allocation5 + $0x1e0] sm:$0xff]
    %v104 = vld [vmem:[#allocation5 + $0x1e8] sm:$0xff]
    %v105 = vld [vmem:[#allocation5 + $0x1f0] sm:$0xff]
    %v106 = vld [vmem:[#allocation5 + $0x1f8] sm:$0xff]
    %v107 = vld [vmem:[#allocation5 + $0x200] sm:$0xff]
    %v108 = vld [vmem:[#allocation5 + $0x208] sm:$0xff]
    %v109 = vld [vmem:[#allocation5 + $0x210] sm:$0xff]
    %v110 = vld [vmem:[#allocation5 + $0x218] sm:$0xff]
    %v111 = vld [vmem:[#allocation5 + $0x220] sm:$0xff]
    %v112 = vld [vmem:[#allocation5 + $0x228] sm:$0xff]
    %v113 = vld [vmem:[#allocation5 + $0x230] sm:$0xff]
    %v114 = vld [vmem:[#allocation5 + $0x238] sm:$0xff]
    %v115 = vld [vmem:[#allocation5 + $0x240] sm:$0xff]
    %v116 = vld [vmem:[#allocation5 + $0x248] sm:$0xff]
    %v117 = vld [vmem:[#allocation5 + $0x250] sm:$0xff]
    %v118 = vld [vmem:[#allocation5 + $0x258] sm:$0xff]
    %v119 = vld [vmem:[#allocation5 + $0x260] sm:$0xff]
    %v120 = vld [vmem:[#allocation5 + $0x268] sm:$0xff]
    %v121 = vld [vmem:[#allocation5 + $0x270] sm:$0xff]
    %v122 = vld [vmem:[#allocation5 + $0x278] sm:$0xff]
    %v123 = vld [vmem:[#allocation5 + $0x280] sm:$0xff]
    %v124 = vld [vmem:[#allocation5 + $0x288] sm:$0xff]
    %v125 = vld [vmem:[#allocation5 + $0x290] sm:$0xff]
    %v126 = vld [vmem:[#allocation5 + $0x298] sm:$0xff]
    %v127 = vld [vmem:[#allocation5 + $0x2a0] sm:$0xff]
    %v128 = vld [vmem:[#allocation5 + $0x2a8] sm:$0xff]
    %v129 = vld [vmem:[#allocation5 + $0x2b0] sm:$0xff]
    %v130 = vld [vmem:[#allocation5 + $0x2b8] sm:$0xff]
    %v131 = vld [vmem:[#allocation5 + $0x2c0] sm:$0xff]
    %v132 = vld [vmem:[#allocation5 + $0x2c8] sm:$0xff]
    %v133 = vld [vmem:[#allocation5 + $0x2d0] sm:$0xff]
    %v134 = vld [vmem:[#allocation5 + $0x2d8] sm:$0xff]
    %v135 = vld [vmem:[#allocation5 + $0x2e0] sm:$0xff]
    %v136 = vld [vmem:[#allocation5 + $0x2e8] sm:$0xff]
    %v137 = vld [vmem:[#allocation5 + $0x2f0] sm:$0xff]
    %v138 = vld [vmem:[#allocation5 + $0x2f8] sm:$0xff]
    %v139 = vld [vmem:[#allocation5 + $0x300] sm:$0xff]
    %v140 = vld [vmem:[#allocation5 + $0x308] sm:$0xff]
    %v141 = vld [vmem:[#allocation5 + $0x310] sm:$0xff]
    %v142 = vld [vmem:[#allocation5 + $0x318] sm:$0xff]
    %v143 = vld [vmem:[#allocation5 + $0x320] sm:$0xff]
    %v144 = vld [vmem:[#allocation5 + $0x328] sm:$0xff]
    %v145 = vld [vmem:[#allocation5 + $0x330] sm:$0xff]
    %v146 = vld [vmem:[#allocation5 + $0x338] sm:$0xff]
    %v147 = vld [vmem:[#allocation5 + $0x340] sm:$0xff]
    %v148 = vld [vmem:[#allocation5 + $0x348] sm:$0xff]
    %v149 = vld [vmem:[#allocation5 + $0x350] sm:$0xff]
    %v150 = vld [vmem:[#allocation5 + $0x358] sm:$0xff]
    %v151 = vld [vmem:[#allocation5 + $0x360] sm:$0xff]
    %v152 = vld [vmem:[#allocation5 + $0x368] sm:$0xff]
    %v153 = vld [vmem:[#allocation5 + $0x370] sm:$0xff]
    %v154 = vld [vmem:[#allocation5 + $0x378] sm:$0xff]
    %v155 = vld [vmem:[#allocation5 + $0x380] sm:$0xff]
    %v156 = vld [vmem:[#allocation5 + $0x388] sm:$0xff]
    %v157 = vld [vmem:[#allocation5 + $0x390] sm:$0xff]
    %v158 = vld [vmem:[#allocation5 + $0x398] sm:$0xff]
    %v159 = vld [vmem:[#allocation5 + $0x3a0] sm:$0xff]
    %v160 = vld [vmem:[#allocation5 + $0x3a8] sm:$0xff]
    %v161 = vld [vmem:[#allocation5 + $0x3b0] sm:$0xff]
    %v162 = vld [vmem:[#allocation5 + $0x3b8] sm:$0xff]
    %v163 = vld [vmem:[#allocation5 + $0x3c0] sm:$0xff]
    %v164 = vld [vmem:[#allocation5 + $0x3c8] sm:$0xff]
    %v165 = vld [vmem:[#allocation5 + $0x3d0] sm:$0xff]
    %v166 = vld [vmem:[#allocation5 + $0x3d8] sm:$0xff]
    %v167 = vld [vmem:[#allocation5 + $0x3e0] sm:$0xff]
    %v168 = vld [vmem:[#allocation5 + $0x3e8] sm:$0xff]
    %v169 = vld [vmem:[#allocation5 + $0x3f0] sm:$0xff]
    %v170 = vld [vmem:[#allocation5 + $0x3f8] sm:$0xff]
    %v171 = vld [vmem:[%s2] sm:$0x1]
    %v173 = vlaneseq
    %v174 = vshrl.u32 %v173, 7
    %v175 = vsub.s32 0, %v174
    %v176 = vrot.slane %v171, %v175
    %v180 = vcombine.high %v41, %v41
    %v182 = vunpack.c.l.s4 1983009808
    %v183 = vunpack.c.0.s8 %v182
    %v184 = vlaneseq
    %v185 = vshrl.u32 %v184, 7
    %v186 = vsub.s32 %v183, %v185
    %v187 = vrot.slane %v41, %v186
    %v189 = vunpack.c.l.s4 1983009808
    %v190 = vunpack.c.0.s8 %v189
    %v191 = vlaneseq
    %v192 = vshrl.u32 %v191, 7
    %v193 = vsub.s32 %v190, %v192
    %v194 = vrot.slane %v180, %v193
    %v195 = vcombine.high %v187, %v187
    %v196 = vcombine.high %v194, %v194
    %v197 = vcombine.high %v42, %v42
    %v199 = vunpack.c.l.s4 1983009808
    %v200 = vunpack.c.0.s8 %v199
    %v201 = vlaneseq
    %v202 = vshrl.u32 %v201, 7
    %v203 = vsub.s32 %v200, %v202
    %v204 = vrot.slane %v42, %v203
    %v206 = vunpack.c.l.s4 1983009808
    %v207 = vunpack.c.0.s8 %v206
    %v208 = vlaneseq
    %v209 = vshrl.u32 %v208, 7
    %v210 = vsub.s32 %v207, %v209
    %v211 = vrot.slane %v197, %v210
    %v212 = vcombine.high %v204, %v204
    %v213 = vcombine.high %v211, %v211
    %222 = vmatprep.subr.mxu0 0.0
    %223 = vmatpush1.msra.mxu0 %v58
    %224 = vmatprep.subr.mxu0 0.0
    %225 = vmatpush1.msra.mxu0 %v57
    %226 = vmatprep.subr.mxu0 0.0
    %227 = vmatpush1.msra.mxu0 %v56
    %228 = vmatprep.subr.mxu0 0.0
    %229 = vmatpush1.msra.mxu0 %v55
    %230 = vmatprep.subr.mxu0 0.0
    %231 = vmatpush1.msra.mxu0 %v54
    %232 = vmatprep.subr.mxu0 0.0
    %233 = vmatpush1.msra.mxu0 %v53
    %234 = vmatprep.subr.mxu0 0.0
    %235 = vmatpush1.msra.mxu0 %v52
    %236 = vmatprep.subr.mxu0 0.0
    %237 = vmatpush1.msra.mxu0 %v51
    %238 = vmatprep.subr.mxu0 0.0
    %239 = vmatpush1.msra.mxu0 %v50
    %240 = vmatprep.subr.mxu0 0.0
    %241 = vmatpush1.msra.mxu0 %v49
    %242 = vmatprep.subr.mxu0 0.0
    %243 = vmatpush1.msra.mxu0 %v48
    %244 = vmatprep.subr.mxu0 0.0
    %245 = vmatpush1.msra.mxu0 %v47
    %246 = vmatprep.subr.mxu0 0.0
    %247 = vmatpush1.msra.mxu0 %v46
    %248 = vmatprep.subr.mxu0 0.0
    %249 = vmatpush1.msra.mxu0 %v45
    %250 = vmatprep.subr.mxu0 0.0
    %251 = vmatpush1.msra.mxu0 %v44
    %252 = vmatprep.subr.mxu0 0.0
    %253 = vmatpush1.msra.mxu0 %v43
    %254 = vmatprep.subr.mxu0 0.0
    %255 = vmatpush2.msra.mxu0 %v74
    %256 = vmatprep.subr.mxu0 0.0
    %257 = vmatpush2.msra.mxu0 %v73
    %258 = vmatprep.subr.mxu0 0.0
    %259 = vmatpush2.msra.mxu0 %v72
    %260 = vmatprep.subr.mxu0 0.0
    %261 = vmatpush2.msra.mxu0 %v71
    %262 = vmatprep.subr.mxu0 0.0
    %263 = vmatpush2.msra.mxu0 %v70
    %264 = vmatprep.subr.mxu0 0.0
    %265 = vmatpush2.msra.mxu0 %v69
    %266 = vmatprep.subr.mxu0 0.0
    %267 = vmatpush2.msra.mxu0 %v68
    %268 = vmatprep.subr.mxu0 0.0
    %269 = vmatpush2.msra.mxu0 %v67
    %270 = vmatprep.subr.mxu0 0.0
    %271 = vmatpush2.msra.mxu0 %v66
    %272 = vmatprep.subr.mxu0 0.0
    %273 = vmatpush2.msra.mxu0 %v65
    %274 = vmatprep.subr.mxu0 0.0
    %275 = vmatpush2.msra.mxu0 %v64
    %276 = vmatprep.subr.mxu0 0.0
    %277 = vmatpush2.msra.mxu0 %v63
    %278 = vmatprep.subr.mxu0 0.0
    %279 = vmatpush2.msra.mxu0 %v62
    %280 = vmatprep.subr.mxu0 0.0
    %281 = vmatpush2.msra.mxu0 %v61
    %282 = vmatprep.subr.mxu0 0.0
    %283 = vmatpush2.msra.mxu0 %v60
    %284 = vmatprep.subr.mxu0 0.0
    %285 = vmatpush2.msra.mxu0 %v59
    %286 = vmatprep.mubr.f32.mxu0 %v195
    %287 = vmatmul.mubr.f32.gmra.mxu0 %v187
    %v288 = vpop.f32.mrf.mxu0
    %v289 = vadd.f32 %v176, %v288
    %v290 = vpop.f32.mrf.mxu0
    %291 = vdwg.mxu0
    %292 = vmatprep.subr.mxu0 0.0
    %293 = vmatpush1.msra.mxu0 %v90
    %294 = vmatprep.subr.mxu0 0.0
    %295 = vmatpush1.msra.mxu0 %v89
    %296 = vmatprep.subr.mxu0 0.0
    %297 = vmatpush1.msra.mxu0 %v88
    %298 = vmatprep.subr.mxu0 0.0
    %299 = vmatpush1.msra.mxu0 %v87
    %300 = vmatprep.subr.mxu0 0.0
    %301 = vmatpush1.msra.mxu0 %v86
    %302 = vmatprep.subr.mxu0 0.0
    %303 = vmatpush1.msra.mxu0 %v85
    %304 = vmatprep.subr.mxu0 0.0
    %305 = vmatpush1.msra.mxu0 %v84
    %306 = vmatprep.subr.mxu0 0.0
    %307 = vmatpush1.msra.mxu0 %v83
    %308 = vmatprep.subr.mxu0 0.0
    %309 = vmatpush1.msra.mxu0 %v82
    %310 = vmatprep.subr.mxu0 0.0
    %311 = vmatpush1.msra.mxu0 %v81
    %312 = vmatprep.subr.mxu0 0.0
    %313 = vmatpush1.msra.mxu0 %v80
    %314 = vmatprep.subr.mxu0 0.0
    %315 = vmatpush1.msra.mxu0 %v79
    %316 = vmatprep.subr.mxu0 0.0
    %317 = vmatpush1.msra.mxu0 %v78
    %318 = vmatprep.subr.mxu0 0.0
    %319 = vmatpush1.msra.mxu0 %v77
    %320 = vmatprep.subr.mxu0 0.0
    %321 = vmatpush1.msra.mxu0 %v76
    %322 = vmatprep.subr.mxu0 0.0
    %323 = vmatpush1.msra.mxu0 %v75
    %324 = vmatprep.subr.mxu0 0.0
    %325 = vmatpush2.msra.mxu0 %v106
    %326 = vmatprep.subr.mxu0 0.0
    %327 = vmatpush2.msra.mxu0 %v105
    %328 = vmatprep.subr.mxu0 0.0
    %329 = vmatpush2.msra.mxu0 %v104
    %330 = vmatprep.subr.mxu0 0.0
    %331 = vmatpush2.msra.mxu0 %v103
    %332 = vmatprep.subr.mxu0 0.0
    %333 = vmatpush2.msra.mxu0 %v102
    %334 = vmatprep.subr.mxu0 0.0
    %335 = vmatpush2.msra.mxu0 %v101
    %336 = vmatprep.subr.mxu0 0.0
    %337 = vmatpush2.msra.mxu0 %v100
    %338 = vmatprep.subr.mxu0 0.0
    %339 = vmatpush2.msra.mxu0 %v99
    %340 = vmatprep.subr.mxu0 0.0
    %341 = vmatpush2.msra.mxu0 %v98
    %342 = vmatprep.subr.mxu0 0.0
    %343 = vmatpush2.msra.mxu0 %v97
    %344 = vmatprep.subr.mxu0 0.0
    %345 = vmatpush2.msra.mxu0 %v96
    %346 = vmatprep.subr.mxu0 0.0
    %347 = vmatpush2.msra.mxu0 %v95
    %348 = vmatprep.subr.mxu0 0.0
    %349 = vmatpush2.msra.mxu0 %v94
    %350 = vmatprep.subr.mxu0 0.0
    %351 = vmatpush2.msra.mxu0 %v93
    %352 = vmatprep.subr.mxu0 0.0
    %353 = vmatpush2.msra.mxu0 %v92
    %354 = vmatprep.subr.mxu0 0.0
    %355 = vmatpush2.msra.mxu0 %v91
    %356 = vmatprep.mubr.f32.mxu0 %v196
    %357 = vmatmul.mubr.f32.gmra.mxu0 %v194
    %v358 = vpop.f32.mrf.mxu0
    %v359 = vadd.f32 %v289, %v358
    %v360 = vpop.f32.mrf.mxu0
    %361 = vdwg.mxu0
    %362 = vmatprep.subr.mxu0 0.0
    %363 = vmatpush1.msra.mxu0 %v122
    %364 = vmatprep.subr.mxu0 0.0
    %365 = vmatpush1.msra.mxu0 %v121
    %366 = vmatprep.subr.mxu0 0.0
    %367 = vmatpush1.msra.mxu0 %v120
    %368 = vmatprep.subr.mxu0 0.0
    %369 = vmatpush1.msra.mxu0 %v119
    %370 = vmatprep.subr.mxu0 0.0
    %371 = vmatpush1.msra.mxu0 %v118
    %372 = vmatprep.subr.mxu0 0.0
    %373 = vmatpush1.msra.mxu0 %v117
    %374 = vmatprep.subr.mxu0 0.0
    %375 = vmatpush1.msra.mxu0 %v116
    %376 = vmatprep.subr.mxu0 0.0
    %377 = vmatpush1.msra.mxu0 %v115
    %378 = vmatprep.subr.mxu0 0.0
    %379 = vmatpush1.msra.mxu0 %v114
    %380 = vmatprep.subr.mxu0 0.0
    %381 = vmatpush1.msra.mxu0 %v113
    %382 = vmatprep.subr.mxu0 0.0
    %383 = vmatpush1.msra.mxu0 %v112
    %384 = vmatprep.subr.mxu0 0.0
    %385 = vmatpush1.msra.mxu0 %v111
    %386 = vmatprep.subr.mxu0 0.0
    %387 = vmatpush1.msra.mxu0 %v110
    %388 = vmatprep.subr.mxu0 0.0
    %389 = vmatpush1.msra.mxu0 %v109
    %390 = vmatprep.subr.mxu0 0.0
    %391 = vmatpush1.msra.mxu0 %v108
    %392 = vmatprep.subr.mxu0 0.0
    %393 = vmatpush1.msra.mxu0 %v107
    %394 = vmatprep.subr.mxu0 0.0
    %395 = vmatpush2.msra.mxu0 %v138
    %396 = vmatprep.subr.mxu0 0.0
    %397 = vmatpush2.msra.mxu0 %v137
    %398 = vmatprep.subr.mxu0 0.0
    %399 = vmatpush2.msra.mxu0 %v136
    %400 = vmatprep.subr.mxu0 0.0
    %401 = vmatpush2.msra.mxu0 %v135
    %402 = vmatprep.subr.mxu0 0.0
    %403 = vmatpush2.msra.mxu0 %v134
    %404 = vmatprep.subr.mxu0 0.0
    %405 = vmatpush2.msra.mxu0 %v133
    %406 = vmatprep.subr.mxu0 0.0
    %407 = vmatpush2.msra.mxu0 %v132
    %408 = vmatprep.subr.mxu0 0.0
    %409 = vmatpush2.msra.mxu0 %v131
    %410 = vmatprep.subr.mxu0 0.0
    %411 = vmatpush2.msra.mxu0 %v130
    %412 = vmatprep.subr.mxu0 0.0
    %413 = vmatpush2.msra.mxu0 %v129
    %414 = vmatprep.subr.mxu0 0.0
    %415 = vmatpush2.msra.mxu0 %v128
    %416 = vmatprep.subr.mxu0 0.0
    %417 = vmatpush2.msra.mxu0 %v127
    %418 = vmatprep.subr.mxu0 0.0
    %419 = vmatpush2.msra.mxu0 %v126
    %420 = vmatprep.subr.mxu0 0.0
    %421 = vmatpush2.msra.mxu0 %v125
    %422 = vmatprep.subr.mxu0 0.0
    %423 = vmatpush2.msra.mxu0 %v124
    %424 = vmatprep.subr.mxu0 0.0
    %425 = vmatpush2.msra.mxu0 %v123
    %426 = vmatprep.mubr.f32.mxu0 %v212
    %427 = vmatmul.mubr.f32.gmra.mxu0 %v204
    %v428 = vpop.f32.mrf.mxu0
    %v429 = vadd.f32 %v359, %v428
    %v430 = vpop.f32.mrf.mxu0
    %431 = vdwg.mxu0
    %432 = vmatprep.subr.mxu0 0.0
    %433 = vmatpush1.msra.mxu0 %v154
    %434 = vmatprep.subr.mxu0 0.0
    %435 = vmatpush1.msra.mxu0 %v153
    %436 = vmatprep.subr.mxu0 0.0
    %437 = vmatpush1.msra.mxu0 %v152
    %438 = vmatprep.subr.mxu0 0.0
    %439 = vmatpush1.msra.mxu0 %v151
    %440 = vmatprep.subr.mxu0 0.0
    %441 = vmatpush1.msra.mxu0 %v150
    %442 = vmatprep.subr.mxu0 0.0
    %443 = vmatpush1.msra.mxu0 %v149
    %444 = vmatprep.subr.mxu0 0.0
    %445 = vmatpush1.msra.mxu0 %v148
    %446 = vmatprep.subr.mxu0 0.0
    %447 = vmatpush1.msra.mxu0 %v147
    %448 = vmatprep.subr.mxu0 0.0
    %449 = vmatpush1.msra.mxu0 %v146
    %450 = vmatprep.subr.mxu0 0.0
    %451 = vmatpush1.msra.mxu0 %v145
    %452 = vmatprep.subr.mxu0 0.0
    %453 = vmatpush1.msra.mxu0 %v144
    %454 = vmatprep.subr.mxu0 0.0
    %455 = vmatpush1.msra.mxu0 %v143
    %456 = vmatprep.subr.mxu0 0.0
    %457 = vmatpush1.msra.mxu0 %v142
    %458 = vmatprep.subr.mxu0 0.0
    %459 = vmatpush1.msra.mxu0 %v141
    %460 = vmatprep.subr.mxu0 0.0
    %461 = vmatpush1.msra.mxu0 %v140
    %462 = vmatprep.subr.mxu0 0.0
    %463 = vmatpush1.msra.mxu0 %v139
    %464 = vmatprep.subr.mxu0 0.0
    %465 = vmatpush2.msra.mxu0 %v170
    %466 = vmatprep.subr.mxu0 0.0
    %467 = vmatpush2.msra.mxu0 %v169
    %468 = vmatprep.subr.mxu0 0.0
    %469 = vmatpush2.msra.mxu0 %v168
    %470 = vmatprep.subr.mxu0 0.0
    %471 = vmatpush2.msra.mxu0 %v167
    %472 = vmatprep.subr.mxu0 0.0
    %473 = vmatpush2.msra.mxu0 %v166
    %474 = vmatprep.subr.mxu0 0.0
    %475 = vmatpush2.msra.mxu0 %v165
    %476 = vmatprep.subr.mxu0 0.0
    %477 = vmatpush2.msra.mxu0 %v164
    %478 = vmatprep.subr.mxu0 0.0
    %479 = vmatpush2.msra.mxu0 %v163
    %480 = vmatprep.subr.mxu0 0.0
    %481 = vmatpush2.msra.mxu0 %v162
    %482 = vmatprep.subr.mxu0 0.0
    %483 = vmatpush2.msra.mxu0 %v161
    %484 = vmatprep.subr.mxu0 0.0
    %485 = vmatpush2.msra.mxu0 %v160
    %486 = vmatprep.subr.mxu0 0.0
    %487 = vmatpush2.msra.mxu0 %v159
    %488 = vmatprep.subr.mxu0 0.0
    %489 = vmatpush2.msra.mxu0 %v158
    %490 = vmatprep.subr.mxu0 0.0
    %491 = vmatpush2.msra.mxu0 %v157
    %492 = vmatprep.subr.mxu0 0.0
    %493 = vmatpush2.msra.mxu0 %v156
    %494 = vmatprep.subr.mxu0 0.0
    %495 = vmatpush2.msra.mxu0 %v155
    %496 = vmatprep.mubr.f32.mxu0 %v213
    %497 = vmatmul.mubr.f32.gmra.mxu0 %v211
    %v498 = vpop.f32.mrf.mxu0
    %v499 = vadd.f32 %v429, %v498
    %v500 = vpop.f32.mrf.mxu0
    %501 = vdwg.mxu0
    %502 = vst [vmem:[#allocation7] sm:$0x3] %v499
    // Predicated region
    $region22: #{tpu_custom_call.1} parent=1 // pred_check
      _
    $region23: #{tpu_custom_call.1} parent=1 // pred_check_branch
      %504 = sbr.rel (0) target = $region25
    $region24: #{tpu_custom_call.1} parent=1 // pred_region
      %s506 = ssub.s32 32, 32
      %507 = vsyncadd [#allocation4], %s506
      %s509 = sshll.u32 [#allocation7], 4
      %s510 = int_to_ptr.vmem [resolvable:$true] %s509
      %512 = dma.vmem_to_hbm [thread:$0]  %s510, 32, %s3, [#allocation4]
    $region25: #{tpu_custom_call.1} parent=1 // pred_fallthru
      _
    // Predicated region
    $region26: #{tpu_custom_call.1} parent=1 // pred_check
      _
    $region27: #{tpu_custom_call.1} parent=1 // pred_check_branch
      %514 = sbr.rel (0) target = $region29
    $region28: #{tpu_custom_call.1} parent=1 // pred_region
      %515 = dma.done [#allocation4], 32
    $region29: #{tpu_custom_call.1} parent=1 // pred_fallthru
      _
    %516 = vsyncpa [#allocation3], 1
    %517 = vsyncpa [#allocation6], 1
    %518 = vsyncpa [#allocation4], 1

</llo_original>
